<compile_context>
chip_gen: v7x
topology: tpu7x:2x2x1
jax: 0.10.0
libtpu: 0.0.40
codegen_flags: <defaults>
</compile_context>

<pallas_src>
import jax
import jax.numpy as jnp
import numpy as np
from jax.experimental import pallas as pl
from jax.experimental.pallas import tpu as pltpu

_LANE = 128          # hidden/tag dims padded to one full lane width
_NEG_INF = -1e30     # bias of padded logit lanes -> exp() underflows to 0


def _round_up(x, m):
    return (x + m - 1) // m * m


def _pick_tile_b(B):
    """Batch-tile rows: big tiles (amortize per-step overhead), but keep
    >= 2 grid steps for mid/large batches so v7x's two TCs both get work."""
    if B <= 8:
        return B                              # one block equal to full batch
    half = _round_up((B + 1) // 2, 8)         # ~half the batch, 8-aligned
    return min(2048, half)


def _w2v_kernel(pref_ref, emb_ref, tag_id_ref,
                w1p_ref, w1e_ref, tag_w1_ref, b1_ref,
                w2_ref, b2_ref, w3_ref, b3_ref, out_ref):
    """One batch tile: fused tag-gather(+fold) + concat-free MLP + log_softmax."""
    f32 = jnp.float32
    cdt = w1p_ref.dtype        # matmul operand dtype (f32 default, bf16 opt-in)

    # --- tag contribution, folded: onehot(prev_tag) @ (tag_tbl @ W1_tag) ----
    ids = tag_id_ref[...]                                        # [TB, 1] i32
    n_tag_rows = tag_w1_ref.shape[0]
    col = jax.lax.broadcasted_iota(jnp.int32, (ids.shape[0], n_tag_rows), 1)
    onehot = (col == ids).astype(cdt)                            # [TB, n_tag]

    # --- fused concat: h1 = pref@W1p + emb@W1e + onehot@tag_W1 + b1 ---------
    h1 = jnp.dot(pref_ref[...].astype(cdt), w1p_ref[...],
                 preferred_element_type=f32)
    h1 = h1 + jnp.dot(emb_ref[...].astype(cdt), w1e_ref[...],
                      preferred_element_type=f32)
    h1 = h1 + jnp.dot(onehot, tag_w1_ref[...], preferred_element_type=f32)
    h1 = jnp.maximum(h1 + b1_ref[...], 0.0)                      # ReLU

    h2 = jnp.dot(h1.astype(cdt), w2_ref[...],
                 preferred_element_type=f32) + b2_ref[...]
    h2 = jnp.maximum(h2, 0.0)                                    # ReLU

    logits = jnp.dot(h2.astype(cdt), w3_ref[...],
                     preferred_element_type=f32) + b3_ref[...]

    # log_softmax over the (lane-padded) tag axis.  Padded lanes carry a
    # -1e30 bias: they never win the max and exp() to exactly 0 in the sum.
    m = jnp.max(logits, axis=-1, keepdims=True)
    shifted = logits - m
    lse = jnp.log(jnp.sum(jnp.exp(shifted), axis=-1, keepdims=True))
    out_ref[...] = shifted - lse                                 # [TB, 128]


def _cost_estimate(B, P, E, n_tag_rows):
    k1 = P + E + n_tag_rows
    flops = 2 * B * (k1 * _LANE + _LANE * _LANE + _LANE * _LANE)
    transcendentals = B * (_LANE + 1)                       # exp lanes + log
    bytes_act = B * (4 * P + 4 * E + 4 + 4 * _LANE)          # in + out rows
    bytes_w = 4 * _LANE * (P + E + n_tag_rows + 1 + _LANE + 1 + _LANE + 1)
    return pl.CostEstimate(flops=flops, transcendentals=transcendentals,
                           bytes_accessed=bytes_act + bytes_w)


def w2v_forward_pallas(pref, emb, tag_ids, params, size_tag, *,
                       slice_output=True):
    """pref [B,P] f32, emb [B,E] f32, tag_ids [B,1] i32 -> log_probs."""
    B, P = pref.shape
    E = emb.shape[1]
    n_tag_rows = params["tag_w1"].shape[0]

    tile_b = _pick_tile_b(B)
    grid = (pl.cdiv(B, tile_b),)       # ragged last block handled by Pallas

    batch_spec = lambda cols: pl.BlockSpec((tile_b, cols), lambda i: (i, 0))
    resident = lambda arr: pl.BlockSpec(arr.shape, lambda i: (0, 0))

    out = pl.pallas_call(
        _w2v_kernel,
        out_shape=jax.ShapeDtypeStruct((B, _LANE), jnp.float32),
        grid=grid,
        in_specs=[
            batch_spec(P),                        # prefix features
            batch_spec(E),                        # word embeddings (flattened)
            batch_spec(1),                        # prev_tag ids
            resident(params["w1p"]), resident(params["w1e"]),
            resident(params["tag_w1"]), resident(params["b1"]),
            resident(params["w2"]), resident(params["b2"]),
            resident(params["w3"]), resident(params["b3"]),
        ],
        out_specs=batch_spec(_LANE),              # lane-dense 128-wide slab
        compiler_params=pltpu.CompilerParams(
            dimension_semantics=("parallel",),
            vmem_limit_bytes=48 * 1024 * 1024),
        cost_estimate=_cost_estimate(B, P, E, n_tag_rows),
    )(pref, emb, tag_ids,
      params["w1p"], params["w1e"], params["tag_w1"], params["b1"],
      params["w2"], params["b2"], params["w3"], params["b3"])

    if slice_output:
        return out[:, :size_tag]
    return out     # padded 128-lane slab; valid lanes are [:, :size_tag]


class W2VEmbeddingPallas:
    """JAX/Pallas port of the PyTorch W2VEmbedding module (forward pass)."""

    H1, H2 = 120, 30

    def __init__(self, embedding_dim, tag_embedding_dim, size_prefix,
                 size_tag, context_size, key, matmul_dtype=jnp.float32):
        self.size_tag = size_tag
        self.word_dim = context_size * embedding_dim
        in_dim = self.word_dim + size_prefix + tag_embedding_dim

        ks = jax.random.split(key, 7)
        tag_tbl = jax.random.normal(
            ks[0], (size_tag + 1, tag_embedding_dim), jnp.float32)

        def linear(kw, kb, fan_in, fan_out):
            bound = 1.0 / np.sqrt(fan_in)
            w = jax.random.uniform(kw, (fan_in, fan_out), jnp.float32, -bound, bound)
            b = jax.random.uniform(kb, (1, fan_out), jnp.float32, -bound, bound)
            return w, b

        w1, b1 = linear(ks[1], ks[2], in_dim, self.H1)
        w2, b2 = linear(ks[3], ks[4], self.H1, self.H2)
        w3, b3 = linear(ks[5], ks[6], self.H2, size_tag)

        # unpadded copies for the pure-JAX reference
        self._ref_params = (tag_tbl, w1, b1, w2, b2, w3, b3)

        # Kernel-side parameters: split W1 by input slice (removes the concat),
        # fold the tag table into its W1 slice, and zero-pad hidden/tag dims to
        # 128 lanes so matmul outputs and the final store are lane-dense.
        # Padded logit lanes get a -1e30 bias.
        P, E = size_prefix, self.word_dim
        n_tag_rows = _round_up(size_tag + 1, 8)    # sublane-friendly tag rows
        pad_cols = lambda w: jnp.pad(w, ((0, 0), (0, _LANE - w.shape[1])))
        pad_rows = lambda w, n: jnp.pad(w, ((0, n - w.shape[0]), (0, 0)))

        tag_w1 = pad_rows(tag_tbl @ w1[P + E:], n_tag_rows)   # [n_tag_rows, 120]
        cdt = matmul_dtype
        self.params = dict(
            w1p=pad_cols(w1[:P]).astype(cdt),
            w1e=pad_cols(w1[P:P + E]).astype(cdt),
            tag_w1=pad_cols(tag_w1).astype(cdt),
            b1=pad_cols(b1),
            w2=pad_cols(pad_rows(w2, _LANE)).astype(cdt),
            b2=pad_cols(b2),
            w3=pad_cols(pad_rows(w3, _LANE)).astype(cdt),
            b3=jnp.pad(b3, ((0, 0), (0, _LANE - size_tag)),
                       constant_values=_NEG_INF),
        )

        # One XLA executable around the pallas_call.
        self._fwd = jax.jit(self._forward_impl)

    def _forward_impl(self, inputs, inputs_pref, prev_tag):
        B = inputs.shape[0]
        emb = inputs.reshape(B, -1)
        pref = inputs_pref.reshape(B, -1)
        tag_ids = prev_tag.reshape(B, 1).astype(jnp.int32)
        return w2v_forward_pallas(pref, emb, tag_ids, self.params, self.size_tag)

    def forward(self, inputs, inputs_pref, prev_tag, batch_size):
        del batch_size  # kept for API parity with the PyTorch module
        return self._fwd(inputs, inputs_pref, prev_tag)

    def forward_ref(self, inputs, inputs_pref, prev_tag, batch_size):
        # pure-JAX reference (unpadded params) for correctness checking
        tag_tbl, w1, b1, w2, b2, w3, b3 = self._ref_params
        embeds = inputs.reshape(batch_size, -1)
        tag_embeds = jnp.take(tag_tbl, prev_tag.reshape(-1), axis=0
                              ).reshape(batch_size, -1)
        pref = inputs_pref.reshape(batch_size, -1)
        x = jnp.concatenate((pref, embeds, tag_embeds), axis=-1)
        h = jax.nn.relu(x @ w1 + b1)
        h = jax.nn.relu(h @ w2 + b2)
        logits = h @ w3 + b3
        return jax.nn.log_softmax(logits, axis=1)


if __name__ == "__main__":
    # small shapes consistent with the module's forward()
    embedding_dim = 16
    tag_embedding_dim = 8
    size_prefix = 12
    size_tag = 10
    context_size = 4
    batch_size = 8

    key = jax.random.PRNGKey(0)
    k_param, k_in, k_pref, k_tag = jax.random.split(key, 4)

    model = W2VEmbeddingPallas(embedding_dim, tag_embedding_dim, size_prefix,
                               size_tag, context_size, k_param)

    inputs = jax.random.normal(k_in, (batch_size, context_size, embedding_dim),
                               jnp.float32)
    inputs_pref = jax.random.normal(k_pref, (batch_size, size_prefix), jnp.float32)
    prev_tag = jax.random.randint(k_tag, (batch_size,), 0, size_tag + 1,
                                  dtype=jnp.int32)

    log_probs = model.forward(inputs, inputs_pref, prev_tag, batch_size)
    log_probs = jax.block_until_ready(log_probs)

    ref = model.forward_ref(inputs, inputs_pref, prev_tag, batch_size)
    np.testing.assert_allclose(np.asarray(log_probs), np.asarray(ref),
                               rtol=1e-4, atol=1e-4)
    assert log_probs.shape == (batch_size, size_tag)
    print("KERNEL_OK")
</pallas_src>

<mosaic_0001>
module attributes {stable_mosaic.version = 11 : i64} {
  func.func @_w2v_kernel(%arg0: i32, %arg1: memref<8x12xf32, #tpu.memory_space<vmem>>, %arg2: memref<8x64xf32, #tpu.memory_space<vmem>>, %arg3: memref<8x1xi32, #tpu.memory_space<vmem>>, %arg4: memref<12x128xf32, #tpu.memory_space<vmem>>, %arg5: memref<64x128xf32, #tpu.memory_space<vmem>>, %arg6: memref<16x128xf32, #tpu.memory_space<vmem>>, %arg7: memref<1x128xf32, #tpu.memory_space<vmem>>, %arg8: memref<128x128xf32, #tpu.memory_space<vmem>>, %arg9: memref<1x128xf32, #tpu.memory_space<vmem>>, %arg10: memref<128x128xf32, #tpu.memory_space<vmem>>, %arg11: memref<1x128xf32, #tpu.memory_space<vmem>>, %arg12: memref<8x128xf32, #tpu.memory_space<vmem>>) attributes {dimension_semantics = [#tpu.dimension_semantics<parallel>], iteration_bounds = array<i64: 1>, scalar_prefetch = 0 : i64, scratch_operands = 0 : i64, tpu.core_type = #tpu.core_type<tc>, window_params = [{transform_indices = @transform_0, window_bounds = array<i64: 8, 12>}, {transform_indices = @transform_1, window_bounds = array<i64: 8, 64>}, {transform_indices = @transform_2, window_bounds = array<i64: 8, 1>}, {pipeline_mode = #tpu.pipeline_mode<synchronous>, transform_indices = @transform_3, window_bounds = array<i64: 12, 128>}, {pipeline_mode = #tpu.pipeline_mode<synchronous>, transform_indices = @transform_4, window_bounds = array<i64: 64, 128>}, {pipeline_mode = #tpu.pipeline_mode<synchronous>, transform_indices = @transform_5, window_bounds = array<i64: 16, 128>}, {pipeline_mode = #tpu.pipeline_mode<synchronous>, transform_indices = @transform_6, window_bounds = array<i64: 1, 128>}, {pipeline_mode = #tpu.pipeline_mode<synchronous>, transform_indices = @transform_7, window_bounds = array<i64: 128, 128>}, {pipeline_mode = #tpu.pipeline_mode<synchronous>, transform_indices = @transform_8, window_bounds = array<i64: 1, 128>}, {pipeline_mode = #tpu.pipeline_mode<synchronous>, transform_indices = @transform_9, window_bounds = array<i64: 128, 128>}, {pipeline_mode = #tpu.pipeline_mode<synchronous>, transform_indices = @transform_10, window_bounds = array<i64: 1, 128>}, {transform_indices = @transform_11, window_bounds = array<i64: 8, 128>}]} {
    %c0 = arith.constant 0 : index
    %c0_0 = arith.constant 0 : index
    %0 = vector.load %arg3[%c0, %c0_0] : memref<8x1xi32, #tpu.memory_space<vmem>>, vector<8x1xi32>
    %1 = tpu.iota {dimensions = array<i32: 1>} : vector<8x16xi32>
    %2 = vector.broadcast %0 : vector<8x1xi32> to vector<8x16xi32>
    %3 = arith.cmpi eq, %1, %2 : vector<8x16xi32>
    %4 = arith.extui %3 : vector<8x16xi1> to vector<8x16xi32>
    %5 = arith.sitofp %4 : vector<8x16xi32> to vector<8x16xf32>
    %c0_1 = arith.constant 0 : index
    %c0_2 = arith.constant 0 : index
    %6 = vector.load %arg1[%c0_1, %c0_2] : memref<8x12xf32, #tpu.memory_space<vmem>>, vector<8x12xf32>
    %c0_3 = arith.constant 0 : index
    %c0_4 = arith.constant 0 : index
    %7 = vector.load %arg4[%c0_3, %c0_4] : memref<12x128xf32, #tpu.memory_space<vmem>>, vector<12x128xf32>
    %cst = arith.constant dense<0.000000e+00> : vector<8x128xf32>
    %8 = tpu.matmul %6, %7, %cst {dimension_numbers = #tpu.dot_dimension_numbers<[1], [0], [0], [1], [0, 0, 1, 1], [], []>} : vector<8x12xf32>, vector<12x128xf32>, vector<8x128xf32> -> vector<8x128xf32>
    %c0_5 = arith.constant 0 : index
    %c0_6 = arith.constant 0 : index
    %9 = vector.load %arg2[%c0_5, %c0_6] : memref<8x64xf32, #tpu.memory_space<vmem>>, vector<8x64xf32>
    %c0_7 = arith.constant 0 : index
    %c0_8 = arith.constant 0 : index
    %10 = vector.load %arg5[%c0_7, %c0_8] : memref<64x128xf32, #tpu.memory_space<vmem>>, vector<64x128xf32>
    %cst_9 = arith.constant dense<0.000000e+00> : vector<8x128xf32>
    %11 = tpu.matmul %9, %10, %cst_9 {dimension_numbers = #tpu.dot_dimension_numbers<[1], [0], [0], [1], [0, 0, 1, 1], [], []>} : vector<8x64xf32>, vector<64x128xf32>, vector<8x128xf32> -> vector<8x128xf32>
    %12 = arith.addf %8, %11 : vector<8x128xf32>
    %c0_10 = arith.constant 0 : index
    %c0_11 = arith.constant 0 : index
    %13 = vector.load %arg6[%c0_10, %c0_11] : memref<16x128xf32, #tpu.memory_space<vmem>>, vector<16x128xf32>
    %cst_12 = arith.constant dense<0.000000e+00> : vector<8x128xf32>
    %14 = tpu.matmul %5, %13, %cst_12 {dimension_numbers = #tpu.dot_dimension_numbers<[1], [0], [0], [1], [0, 0, 1, 1], [], []>} : vector<8x16xf32>, vector<16x128xf32>, vector<8x128xf32> -> vector<8x128xf32>
    %15 = arith.addf %12, %14 : vector<8x128xf32>
    %c0_13 = arith.constant 0 : index
    %c0_14 = arith.constant 0 : index
    %16 = vector.load %arg7[%c0_13, %c0_14] : memref<1x128xf32, #tpu.memory_space<vmem>>, vector<1x128xf32>
    %17 = vector.broadcast %16 : vector<1x128xf32> to vector<8x128xf32>
    %18 = arith.addf %15, %17 : vector<8x128xf32>
    %cst_15 = arith.constant 0.000000e+00 : f32
    %19 = vector.broadcast %cst_15 : f32 to vector<8x128xf32>
    %20 = arith.maximumf %18, %19 : vector<8x128xf32>
    %c0_16 = arith.constant 0 : index
    %c0_17 = arith.constant 0 : index
    %21 = vector.load %arg8[%c0_16, %c0_17] : memref<128x128xf32, #tpu.memory_space<vmem>>, vector<128x128xf32>
    %cst_18 = arith.constant dense<0.000000e+00> : vector<8x128xf32>
    %22 = tpu.matmul %20, %21, %cst_18 {dimension_numbers = #tpu.dot_dimension_numbers<[1], [0], [0], [1], [0, 0, 1, 1], [], []>} : vector<8x128xf32>, vector<128x128xf32>, vector<8x128xf32> -> vector<8x128xf32>
    %c0_19 = arith.constant 0 : index
    %c0_20 = arith.constant 0 : index
    %23 = vector.load %arg9[%c0_19, %c0_20] : memref<1x128xf32, #tpu.memory_space<vmem>>, vector<1x128xf32>
    %24 = vector.broadcast %23 : vector<1x128xf32> to vector<8x128xf32>
    %25 = arith.addf %22, %24 : vector<8x128xf32>
    %cst_21 = arith.constant 0.000000e+00 : f32
    %26 = vector.broadcast %cst_21 : f32 to vector<8x128xf32>
    %27 = arith.maximumf %25, %26 : vector<8x128xf32>
    %c0_22 = arith.constant 0 : index
    %c0_23 = arith.constant 0 : index
    %28 = vector.load %arg10[%c0_22, %c0_23] : memref<128x128xf32, #tpu.memory_space<vmem>>, vector<128x128xf32>
    %cst_24 = arith.constant dense<0.000000e+00> : vector<8x128xf32>
    %29 = tpu.matmul %27, %28, %cst_24 {dimension_numbers = #tpu.dot_dimension_numbers<[1], [0], [0], [1], [0, 0, 1, 1], [], []>} : vector<8x128xf32>, vector<128x128xf32>, vector<8x128xf32> -> vector<8x128xf32>
    %c0_25 = arith.constant 0 : index
    %c0_26 = arith.constant 0 : index
    %30 = vector.load %arg11[%c0_25, %c0_26] : memref<1x128xf32, #tpu.memory_space<vmem>>, vector<1x128xf32>
    %31 = vector.broadcast %30 : vector<1x128xf32> to vector<8x128xf32>
    %32 = arith.addf %29, %31 : vector<8x128xf32>
    %cst_27 = arith.constant dense<0xFF800000> : vector<8xf32>
    %33 = vector.multi_reduction <maximumf>, %32, %cst_27 [1] : vector<8x128xf32> to vector<8xf32>
    %34 = vector.shape_cast %33 : vector<8xf32> to vector<8x1xf32>
    %35 = vector.broadcast %34 : vector<8x1xf32> to vector<8x128xf32>
    %36 = arith.subf %32, %35 : vector<8x128xf32>
    %37 = math.exp %36 : vector<8x128xf32>
    %cst_28 = arith.constant dense<0.000000e+00> : vector<8xf32>
    %38 = vector.multi_reduction <add>, %37, %cst_28 [1] : vector<8x128xf32> to vector<8xf32>
    %39 = vector.shape_cast %38 : vector<8xf32> to vector<8x1xf32>
    %40 = math.log %39 : vector<8x1xf32>
    %41 = vector.broadcast %40 : vector<8x1xf32> to vector<8x128xf32>
    %42 = arith.subf %36, %41 : vector<8x128xf32>
    %c0_29 = arith.constant 0 : index
    %c0_30 = arith.constant 0 : index
    %43 = vector.load %arg12[%c0_29, %c0_30] : memref<8x128xf32, #tpu.memory_space<vmem>>, vector<8x128xf32>
    tpu.vector_store %arg12[%c0_29, %c0_30], %42 {strides = array<i32>} : memref<8x128xf32, #tpu.memory_space<vmem>>, vector<8x128xf32>,
    return
  }
  func.func @transform_0(%arg0: i32) -> (i32, i32) {
    %c0_i32 = arith.constant 0 : i32
    %c0_i32_0 = arith.constant 0 : i32
    return %arg0, %c0_i32 : i32, i32
  }
  func.func @transform_1(%arg0: i32) -> (i32, i32) {
    %c0_i32 = arith.constant 0 : i32
    %c0_i32_0 = arith.constant 0 : i32
    return %arg0, %c0_i32 : i32, i32
  }
  func.func @transform_2(%arg0: i32) -> (i32, i32) {
    %c0_i32 = arith.constant 0 : i32
    %c0_i32_0 = arith.constant 0 : i32
    return %arg0, %c0_i32 : i32, i32
  }
  func.func @transform_3(%arg0: i32) -> (i32, i32) {
    %c0_i32 = arith.constant 0 : i32
    %c0_i32_0 = arith.constant 0 : i32
    %c0_i32_1 = arith.constant 0 : i32
    return %c0_i32, %c0_i32_0 : i32, i32
  }
  func.func @transform_4(%arg0: i32) -> (i32, i32) {
    %c0_i32 = arith.constant 0 : i32
    %c0_i32_0 = arith.constant 0 : i32
    %c0_i32_1 = arith.constant 0 : i32
    return %c0_i32, %c0_i32_0 : i32, i32
  }
  func.func @transform_5(%arg0: i32) -> (i32, i32) {
    %c0_i32 = arith.constant 0 : i32
    %c0_i32_0 = arith.constant 0 : i32
    %c0_i32_1 = arith.constant 0 : i32
    return %c0_i32, %c0_i32_0 : i32, i32
  }
  func.func @transform_6(%arg0: i32) -> (i32, i32) {
    %c0_i32 = arith.constant 0 : i32
    %c0_i32_0 = arith.constant 0 : i32
    %c0_i32_1 = arith.constant 0 : i32
    return %c0_i32, %c0_i32_0 : i32, i32
  }
  func.func @transform_7(%arg0: i32) -> (i32, i32) {
    %c0_i32 = arith.constant 0 : i32
    %c0_i32_0 = arith.constant 0 : i32
    %c0_i32_1 = arith.constant 0 : i32
    return %c0_i32, %c0_i32_0 : i32, i32
  }
  func.func @transform_8(%arg0: i32) -> (i32, i32) {
    %c0_i32 = arith.constant 0 : i32
    %c0_i32_0 = arith.constant 0 : i32
    %c0_i32_1 = arith.constant 0 : i32
    return %c0_i32, %c0_i32_0 : i32, i32
  }
  func.func @transform_9(%arg0: i32) -> (i32, i32) {
    %c0_i32 = arith.constant 0 : i32
    %c0_i32_0 = arith.constant 0 : i32
    %c0_i32_1 = arith.constant 0 : i32
    return %c0_i32, %c0_i32_0 : i32, i32
  }
  func.func @transform_10(%arg0: i32) -> (i32, i32) {
    %c0_i32 = arith.constant 0 : i32
    %c0_i32_0 = arith.constant 0 : i32
    %c0_i32_1 = arith.constant 0 : i32
    return %c0_i32, %c0_i32_0 : i32, i32
  }
  func.func @transform_11(%arg0: i32) -> (i32, i32) {
    %c0_i32 = arith.constant 0 : i32
    %c0_i32_0 = arith.constant 0 : i32
    return %arg0, %c0_i32 : i32, i32
  }
}

</mosaic_0001>

<llo_original>
// kernel: _forward_impl.1
$region0: #{_forward_impl.1}
  #allocation0 [shape = 'u32[]', space=smem, size = 0x4, offset = 0x4, fixed_abs, tag = 'smem constant byte address 0x4 - core index']
  #allocation1 [shape = 'u32[144,128]{1,0:T(1,128)}', space=vmem, size = 0x12000, scoped, tag = 'internal scratch']
  %s0 = inlined_call_operand.hbm [shape: f32[8,12], index: 0, kind: input, shape index: {}]
  %s1 = inlined_call_operand.vmem [shape: f32[8,64], index: 1, kind: input, shape index: {}]
  %s2 = inlined_call_operand.vmem [shape: s32[8,1], index: 2, kind: input, shape index: {}]
  %s3 = inlined_call_operand.hbm [shape: f32[12,128], index: 3, kind: input, shape index: {}]
  %s4 = inlined_call_operand.vmem [shape: f32[64,128], index: 4, kind: input, shape index: {}]
  %s5 = inlined_call_operand.hbm [shape: f32[16,128], index: 5, kind: input, shape index: {}]
  %s6 = inlined_call_operand.vmem [shape: f32[1,128], index: 6, kind: input, shape index: {}]
  %s7 = inlined_call_operand.hbm [shape: f32[128,128], index: 7, kind: input, shape index: {}]
  %s8 = inlined_call_operand.vmem [shape: f32[1,128], index: 8, kind: input, shape index: {}]
  %s9 = inlined_call_operand.hbm [shape: f32[128,128], index: 9, kind: input, shape index: {}]
  %s10 = inlined_call_operand.vmem [shape: f32[1,128], index: 10, kind: input, shape index: {}]
  %s11 = inlined_call_operand.hbm [shape: f32[8,128], index: 11, kind: output, shape index: {}]
  %s12 = sld [smem:[#allocation0]]
  $region74: #{_forward_impl.1} parent=0
    _
  %s14 = ssub.s32 1, %s12
  %s15 = scalar_select 0, %s14, %s12
  $region1: #{_forward_impl.1} parent=0
    #allocation2 [shape = 'u8[4096]{0}', space=vmem, size = 0x1000, scoped, tag = 'input window, operand 0, single buffered']
    #allocation3 [shape = 's32[1]{0}', space=sflag, size = 0x4, scoped, tag = 'scoped memory for _forward_impl.1']
    #allocation4 [shape = 's32[1]{0}', space=sflag, size = 0x4, scoped, tag = 'scoped memory for _forward_impl.1']
    #allocation5 [shape = 'u8[8192]{0}', space=vmem, size = 0x2000, scoped, tag = 'input window, operand 3, single buffered']
    #allocation6 [shape = 's32[1]{0}', space=sflag, size = 0x4, scoped, tag = 'scoped memory for _forward_impl.1']
    #allocation7 [shape = 'u8[8192]{0}', space=vmem, size = 0x2000, scoped, tag = 'input window, operand 5, single buffered']
    #allocation8 [shape = 'u8[65536]{0}', space=vmem, size = 0x10000, scoped, tag = 'input window, operand 7, single buffered']
    #allocation9 [shape = 's32[1]{0}', space=sflag, size = 0x4, scoped, tag = 'scoped memory for _forward_impl.1']
    #allocation10 [shape = 'u8[65536]{0}', space=vmem, size = 0x10000, scoped, tag = 'input window, operand 9, single buffered']
    #allocation11 [shape = 'u8[4096]{0}', space=vmem, size = 0x1000, scoped, tag = 'output window, operand 0, single buffered']
    %16 = vsyncpa [#allocation3], 0
    %17 = vsyncpa [#allocation6], 0
    %18 = vsyncpa [#allocation9], 0
    %19 = vsyncpa [#allocation4], 0
    // Predicated region
    $region2: #{_forward_impl.1} parent=1 // pred_check
      _
    $region3: #{_forward_impl.1} parent=1 // pred_check_branch
      %21 = sbr.rel (0) target = $region5
    $region4: #{_forward_impl.1} parent=1 // pred_region
      %s23 = ssub.s32 128, 128
      %24 = vsyncadd [#allocation3], %s23
      %s26 = sshll.u32 [#allocation2], 4
      %s27 = int_to_ptr.vmem [resolvable:$true] %s26
      %29 = dma.hbm_to_vmem [thread:$0]  %s0, 128, %s27, [#allocation3]
    $region5: #{_forward_impl.1} parent=1 // pred_fallthru
      _
    // Predicated region
    $region6: #{_forward_impl.1} parent=1 // pred_check
      _
    $region7: #{_forward_impl.1} parent=1 // pred_check_branch
      %31 = sbr.rel (0) target = $region9
    $region8: #{_forward_impl.1} parent=1 // pred_region
      _
    $region9: #{_forward_impl.1} parent=1 // pred_fallthru
      _
    // Predicated region
    $region10: #{_forward_impl.1} parent=1 // pred_check
      _
    $region11: #{_forward_impl.1} parent=1 // pred_check_branch
      %33 = sbr.rel (0) target = $region13
    $region12: #{_forward_impl.1} parent=1 // pred_region
      _
    $region13: #{_forward_impl.1} parent=1 // pred_fallthru
      _
    // Predicated region
    $region14: #{_forward_impl.1} parent=1 // pred_check
      _
    $region15: #{_forward_impl.1} parent=1 // pred_check_branch
      %35 = sbr.rel (0) target = $region17
    $region16: #{_forward_impl.1} parent=1 // pred_region
      %s37 = ssub.s32 256, 256
      %38 = vsyncadd [#allocation6], %s37
      %s39 = sshll.u32 [#allocation5], 4
      %s40 = int_to_ptr.vmem [resolvable:$true] %s39
      %45 = dma.hbm_to_vmem [thread:$0]  %s3, 256, %s40, [#allocation6], 128, 128, 8
    $region17: #{_forward_impl.1} parent=1 // pred_fallthru
      _
    // Predicated region
    $region18: #{_forward_impl.1} parent=1 // pred_check
      _
    $region19: #{_forward_impl.1} parent=1 // pred_check_branch
      %47 = sbr.rel (0) target = $region21
    $region20: #{_forward_impl.1} parent=1 // pred_region
      _
    $region21: #{_forward_impl.1} parent=1 // pred_fallthru
      _
    // Predicated region
    $region22: #{_forward_impl.1} parent=1 // pred_check
      _
    $region23: #{_forward_impl.1} parent=1 // pred_check_branch
      %49 = sbr.rel (0) target = $region25
    $region24: #{_forward_impl.1} parent=1 // pred_region
      %s51 = ssub.s32 256, 256
      %52 = vsyncadd [#allocation6], %s51
      %s53 = sshll.u32 [#allocation7], 4
      %s54 = int_to_ptr.vmem [resolvable:$true] %s53
      %59 = dma.hbm_to_vmem [thread:$0]  %s5, 256, %s54, [#allocation6], 128, 128, 8
    $region25: #{_forward_impl.1} parent=1 // pred_fallthru
      _
    // Predicated region
    $region26: #{_forward_impl.1} parent=1 // pred_check
      _
    $region27: #{_forward_impl.1} parent=1 // pred_check_branch
      %61 = sbr.rel (0) target = $region29
    $region28: #{_forward_impl.1} parent=1 // pred_region
      _
    $region29: #{_forward_impl.1} parent=1 // pred_fallthru
      _
    // Predicated region
    $region30: #{_forward_impl.1} parent=1 // pred_check
      _
    $region31: #{_forward_impl.1} parent=1 // pred_check_branch
      %63 = sbr.rel (0) target = $region33
    $region32: #{_forward_impl.1} parent=1 // pred_region
      %s65 = ssub.s32 2048, 2048
      %66 = vsyncadd [#allocation9], %s65
      %s67 = sshll.u32 [#allocation8], 4
      %s68 = int_to_ptr.vmem [resolvable:$true] %s67
      %73 = dma.hbm_to_vmem [thread:$0]  %s7, 2048, %s68, [#allocation9], 128, 128, 8
    $region33: #{_forward_impl.1} parent=1 // pred_fallthru
      _
    // Predicated region
    $region34: #{_forward_impl.1} parent=1 // pred_check
      _
    $region35: #{_forward_impl.1} parent=1 // pred_check_branch
      %75 = sbr.rel (0) target = $region37
    $region36: #{_forward_impl.1} parent=1 // pred_region
      _
    $region37: #{_forward_impl.1} parent=1 // pred_fallthru
      _
    // Predicated region
    $region38: #{_forward_impl.1} parent=1 // pred_check
      _
    $region39: #{_forward_impl.1} parent=1 // pred_check_branch
      %77 = sbr.rel (0) target = $region41
    $region40: #{_forward_impl.1} parent=1 // pred_region
      %s79 = ssub.s32 2048, 2048
      %80 = vsyncadd [#allocation9], %s79
      %s81 = sshll.u32 [#allocation10], 4
      %s82 = int_to_ptr.vmem [resolvable:$true] %s81
      %87 = dma.hbm_to_vmem [thread:$0]  %s9, 2048, %s82, [#allocation9], 128, 128, 8
    $region41: #{_forward_impl.1} parent=1 // pred_fallthru
      _
    // Predicated region
    $region42: #{_forward_impl.1} parent=1 // pred_check
      _
    $region43: #{_forward_impl.1} parent=1 // pred_check_branch
      %89 = sbr.rel (0) target = $region45
    $region44: #{_forward_impl.1} parent=1 // pred_region
      _
    $region45: #{_forward_impl.1} parent=1 // pred_fallthru
      _
    // Predicated region
    $region46: #{_forward_impl.1} parent=1 // pred_check
      _
    $region47: #{_forward_impl.1} parent=1 // pred_check_branch
      %91 = sbr.rel (0) target = $region49
    $region48: #{_forward_impl.1} parent=1 // pred_region
      %92 = dma.done [#allocation3], 128
    $region49: #{_forward_impl.1} parent=1 // pred_fallthru
      _
    // Predicated region
    $region50: #{_forward_impl.1} parent=1 // pred_check
      _
    $region51: #{_forward_impl.1} parent=1 // pred_check_branch
      %94 = sbr.rel (0) target = $region53
    $region52: #{_forward_impl.1} parent=1 // pred_region
      %95 = dma.done [#allocation6], 256
    $region53: #{_forward_impl.1} parent=1 // pred_fallthru
      _
    // Predicated region
    $region54: #{_forward_impl.1} parent=1 // pred_check
      _
    $region55: #{_forward_impl.1} parent=1 // pred_check_branch
      %97 = sbr.rel (0) target = $region57
    $region56: #{_forward_impl.1} parent=1 // pred_region
      %98 = dma.done [#allocation6], 256
    $region57: #{_forward_impl.1} parent=1 // pred_fallthru
      _
    // Predicated region
    $region58: #{_forward_impl.1} parent=1 // pred_check
      _
    $region59: #{_forward_impl.1} parent=1 // pred_check_branch
      %100 = sbr.rel (0) target = $region61
    $region60: #{_forward_impl.1} parent=1 // pred_region
      %101 = dma.done [#allocation9], 2048
    $region61: #{_forward_impl.1} parent=1 // pred_fallthru
      _
    // Predicated region
    $region62: #{_forward_impl.1} parent=1 // pred_check
      _
    $region63: #{_forward_impl.1} parent=1 // pred_check_branch
      %103 = sbr.rel (0) target = $region65
    $region64: #{_forward_impl.1} parent=1 // pred_region
      %104 = dma.done [#allocation9], 2048
    $region65: #{_forward_impl.1} parent=1 // pred_fallthru
      _
    %v105 = vld [vmem:[%s2] sm:$0xff]
    %v106 = vlaneseq
    %v107 = vand.u32 %v106, 127
    %108 = vset.pattern.permute.xlu0 0
    %109 = vperm.xlu0 %108, %v105
    %v110 = vpop.permute.xlu0 %109
    %vm111 = vcmp.eq.s32.totalorder %v107, %v110
    %v112 = vsel %vm111, 1, 0
    %v113 = vcvt.s32.f32 %v112
    %v114 = vld [vmem:[#allocation2] sm:$0xff]
    %v115 = vld [vmem:[#allocation5] sm:$0xff]
    %v116 = vld [vmem:[#allocation5 + $0x8] sm:$0xf]
    %v117 = vld [vmem:[%s1] sm:$0xff]
    %v118 = vld [vmem:[%s4] sm:$0xff]
    %v119 = vld [vmem:[%s4 + $0x8] sm:$0xff]
    %v120 = vld [vmem:[%s4 + $0x10] sm:$0xff]
    %v121 = vld [vmem:[%s4 + $0x18] sm:$0xff]
    %v122 = vld [vmem:[%s4 + $0x20] sm:$0xff]
    %v123 = vld [vmem:[%s4 + $0x28] sm:$0xff]
    %v124 = vld [vmem:[%s4 + $0x30] sm:$0xff]
    %v125 = vld [vmem:[%s4 + $0x38] sm:$0xff]
    %vm126 = vcmask 523264
    %v128 = vsel %vm126, %v117, 0
    %130 = vmatprep.subr.mxu0 0.0
    %131 = vmatpush1.msra.mxu0 %v118
    %132 = vmatprep.subr.mxu0 0.0
    %133 = vmatpush1.msra.mxu0 %v119
    %134 = vmatprep.subr.mxu0 0.0
    %135 = vmatpush1.msra.mxu0 %v120
    %136 = vmatprep.subr.mxu0 0.0
    %137 = vmatpush1.msra.mxu0 %v121
    %138 = vmatprep.subr.mxu0 0.0
    %139 = vmatpush1.msra.mxu0 %v122
    %140 = vmatprep.subr.mxu0 0.0
    %141 = vmatpush1.msra.mxu0 %v123
    %142 = vmatprep.subr.mxu0 0.0
    %143 = vmatpush1.msra.mxu0 %v124
    %144 = vmatprep.subr.mxu0 0.0
    %145 = vmatpush1.msra.mxu0 %v125
    %146 = vmatprep.subr.mxu0 0.0
    %147 = vmatpush1.msra.mxu0 0.0
    %148 = vmatprep.subr.mxu0 0.0
    %149 = vmatpush1.msra.mxu0 0.0
    %150 = vmatprep.subr.mxu0 0.0
    %151 = vmatpush1.msra.mxu0 0.0
    %152 = vmatprep.subr.mxu0 0.0
    %153 = vmatpush1.msra.mxu0 0.0
    %154 = vmatprep.subr.mxu0 0.0
    %155 = vmatpush1.msra.mxu0 0.0
    %156 = vmatprep.subr.mxu0 0.0
    %157 = vmatpush1.msra.mxu0 0.0
    %158 = vmatprep.subr.mxu0 0.0
    %159 = vmatpush1.msra.mxu0 0.0
    %160 = vmatprep.subr.mxu0 0.0
    %161 = vmatpush1.msra.mxu0 0.0
    %162 = vmatprep.subr.mxu0 0.0
    %163 = vmatpush1.msra.mxu0 0.0
    %164 = vmatprep.subr.mxu0 0.0
    %165 = vmatpush1.msra.mxu0 0.0
    %166 = vmatprep.subr.mxu0 0.0
    %167 = vmatpush1.msra.mxu0 0.0
    %168 = vmatprep.subr.mxu0 0.0
    %169 = vmatpush1.msra.mxu0 0.0
    %170 = vmatprep.subr.mxu0 0.0
    %171 = vmatpush1.msra.mxu0 0.0
    %172 = vmatprep.subr.mxu0 0.0
    %173 = vmatpush1.msra.mxu0 0.0
    %174 = vmatprep.subr.mxu0 0.0
    %175 = vmatpush1.msra.mxu0 0.0
    %176 = vmatprep.subr.mxu0 0.0
    %177 = vmatpush1.msra.mxu0 0.0
    %178 = vmatprep.subr.mxu0 0.0
    %179 = vmatpush1.msra.mxu0 0.0
    %180 = vmatprep.subr.mxu0 0.0
    %181 = vmatpush1.msra.mxu0 0.0
    %182 = vmatprep.subr.mxu0 0.0
    %183 = vmatpush1.msra.mxu0 0.0
    %184 = vmatprep.subr.mxu0 0.0
    %185 = vmatpush1.msra.mxu0 0.0
    %186 = vmatprep.subr.mxu0 0.0
    %187 = vmatpush1.msra.mxu0 0.0
    %188 = vmatprep.subr.mxu0 0.0
    %189 = vmatpush1.msra.mxu0 0.0
    %190 = vmatprep.subr.mxu0 0.0
    %191 = vmatpush1.msra.mxu0 0.0
    %192 = vmatprep.subr.mxu0 0.0
    %193 = vmatpush1.msra.mxu0 0.0
    %194 = vmatprep.mubr.f32.mxu0 0.0
    %195 = vmatmul.mubr.f32.gmra.mrb[0].mxu0 %v128
    %v196 = vpop.f32.mrb[0].mxu0
    %v197 = vadd.f32 0.0, %v196
    %v198 = vpop.f32.mrb[0].mxu0
    %199 = vdwg.mxu0
    %vm200 = vcmask 97280
    %v202 = vsel %vm200, %v114, 0
    %vm204 = vcmask 1043456
    %v206 = vsel %vm204, %v116, 0
    %208 = vmatprep.subr.mxu0 0.0
    %209 = vmatpush1.msra.mxu0 %v115
    %210 = vmatprep.subr.mxu0 0.0
    %211 = vmatpush1.msra.mxu0 %v206
    %212 = vmatprep.subr.mxu0 0.0
    %213 = vmatpush1.msra.mxu0 0.0
    %214 = vmatprep.subr.mxu0 0.0
    %215 = vmatpush1.msra.mxu0 0.0
    %216 = vmatprep.subr.mxu0 0.0
    %217 = vmatpush1.msra.mxu0 0.0
    %218 = vmatprep.subr.mxu0 0.0
    %219 = vmatpush1.msra.mxu0 0.0
    %220 = vmatprep.subr.mxu0 0.0
    %221 = vmatpush1.msra.mxu0 0.0
    %222 = vmatprep.subr.mxu0 0.0
    %223 = vmatpush1.msra.mxu0 0.0
    %224 = vmatprep.subr.mxu0 0.0
    %225 = vmatpush1.msra.mxu0 0.0
    %226 = vmatprep.subr.mxu0 0.0
    %227 = vmatpush1.msra.mxu0 0.0
    %228 = vmatprep.subr.mxu0 0.0
    %229 = vmatpush1.msra.mxu0 0.0
    %230 = vmatprep.subr.mxu0 0.0
    %231 = vmatpush1.msra.mxu0 0.0
    %232 = vmatprep.subr.mxu0 0.0
    %233 = vmatpush1.msra.mxu0 0.0
    %234 = vmatprep.subr.mxu0 0.0
    %235 = vmatpush1.msra.mxu0 0.0
    %236 = vmatprep.subr.mxu0 0.0
    %237 = vmatpush1.msra.mxu0 0.0
    %238 = vmatprep.subr.mxu0 0.0
    %239 = vmatpush1.msra.mxu0 0.0
    %240 = vmatprep.subr.mxu0 0.0
    %241 = vmatpush1.msra.mxu0 0.0
    %242 = vmatprep.subr.mxu0 0.0
    %243 = vmatpush1.msra.mxu0 0.0
    %244 = vmatprep.subr.mxu0 0.0
    %245 = vmatpush1.msra.mxu0 0.0
    %246 = vmatprep.subr.mxu0 0.0
    %247 = vmatpush1.msra.mxu0 0.0
    %248 = vmatprep.subr.mxu0 0.0
    %249 = vmatpush1.msra.mxu0 0.0
    %250 = vmatprep.subr.mxu0 0.0
    %251 = vmatpush1.msra.mxu0 0.0
    %252 = vmatprep.subr.mxu0 0.0
    %253 = vmatpush1.msra.mxu0 0.0
    %254 = vmatprep.subr.mxu0 0.0
    %255 = vmatpush1.msra.mxu0 0.0
    %256 = vmatprep.subr.mxu0 0.0
    %257 = vmatpush1.msra.mxu0 0.0
    %258 = vmatprep.subr.mxu0 0.0
    %259 = vmatpush1.msra.mxu0 0.0
    %260 = vmatprep.subr.mxu0 0.0
    %261 = vmatpush1.msra.mxu0 0.0
    %262 = vmatprep.subr.mxu0 0.0
    %263 = vmatpush1.msra.mxu0 0.0
    %264 = vmatprep.subr.mxu0 0.0
    %265 = vmatpush1.msra.mxu0 0.0
    %266 = vmatprep.subr.mxu0 0.0
    %267 = vmatpush1.msra.mxu0 0.0
    %268 = vmatprep.subr.mxu0 0.0
    %269 = vmatpush1.msra.mxu0 0.0
    %270 = vmatprep.subr.mxu0 0.0
    %271 = vmatpush1.msra.mxu0 0.0
    %272 = vmatprep.mubr.f32.mxu0 0.0
    %273 = vmatmul.mubr.f32.gmra.mrb[0].mxu0 %v202
    %v274 = vpop.f32.mrb[0].mxu0
    %v275 = vadd.f32 %v197, %v274
    %v276 = vpop.f32.mrb[0].mxu0
    %277 = vdwg.mxu0
    %v278 = vld [vmem:[#allocation7] sm:$0xff]
    %v279 = vld [vmem:[#allocation7 + $0x8] sm:$0xff]
    %vm280 = vcmask 130048
    %v282 = vsel %vm280, %v113, 0
    %284 = vmatprep.subr.mxu0 0.0
    %285 = vmatpush1.msra.mxu0 %v278
    %286 = vmatprep.subr.mxu0 0.0
    %287 = vmatpush1.msra.mxu0 %v279
    %288 = vmatprep.subr.mxu0 0.0
    %289 = vmatpush1.msra.mxu0 0.0
    %290 = vmatprep.subr.mxu0 0.0
    %291 = vmatpush1.msra.mxu0 0.0
    %292 = vmatprep.subr.mxu0 0.0
    %293 = vmatpush1.msra.mxu0 0.0
    %294 = vmatprep.subr.mxu0 0.0
    %295 = vmatpush1.msra.mxu0 0.0
    %296 = vmatprep.subr.mxu0 0.0
    %297 = vmatpush1.msra.mxu0 0.0
    %298 = vmatprep.subr.mxu0 0.0
    %299 = vmatpush1.msra.mxu0 0.0
    %300 = vmatprep.subr.mxu0 0.0
    %301 = vmatpush1.msra.mxu0 0.0
    %302 = vmatprep.subr.mxu0 0.0
    %303 = vmatpush1.msra.mxu0 0.0
    %304 = vmatprep.subr.mxu0 0.0
    %305 = vmatpush1.msra.mxu0 0.0
    %306 = vmatprep.subr.mxu0 0.0
    %307 = vmatpush1.msra.mxu0 0.0
    %308 = vmatprep.subr.mxu0 0.0
    %309 = vmatpush1.msra.mxu0 0.0
    %310 = vmatprep.subr.mxu0 0.0
    %311 = vmatpush1.msra.mxu0 0.0
    %312 = vmatprep.subr.mxu0 0.0
    %313 = vmatpush1.msra.mxu0 0.0
    %314 = vmatprep.subr.mxu0 0.0
    %315 = vmatpush1.msra.mxu0 0.0
    %316 = vmatprep.subr.mxu0 0.0
    %317 = vmatpush1.msra.mxu0 0.0
    %318 = vmatprep.subr.mxu0 0.0
    %319 = vmatpush1.msra.mxu0 0.0
    %320 = vmatprep.subr.mxu0 0.0
    %321 = vmatpush1.msra.mxu0 0.0
    %322 = vmatprep.subr.mxu0 0.0
    %323 = vmatpush1.msra.mxu0 0.0
    %324 = vmatprep.subr.mxu0 0.0
    %325 = vmatpush1.msra.mxu0 0.0
    %326 = vmatprep.subr.mxu0 0.0
    %327 = vmatpush1.msra.mxu0 0.0
    %328 = vmatprep.subr.mxu0 0.0
    %329 = vmatpush1.msra.mxu0 0.0
    %330 = vmatprep.subr.mxu0 0.0
    %331 = vmatpush1.msra.mxu0 0.0
    %332 = vmatprep.subr.mxu0 0.0
    %333 = vmatpush1.msra.mxu0 0.0
    %334 = vmatprep.subr.mxu0 0.0
    %335 = vmatpush1.msra.mxu0 0.0
    %336 = vmatprep.subr.mxu0 0.0
    %337 = vmatpush1.msra.mxu0 0.0
    %338 = vmatprep.subr.mxu0 0.0
    %339 = vmatpush1.msra.mxu0 0.0
    %340 = vmatprep.subr.mxu0 0.0
    %341 = vmatpush1.msra.mxu0 0.0
    %342 = vmatprep.subr.mxu0 0.0
    %343 = vmatpush1.msra.mxu0 0.0
    %344 = vmatprep.subr.mxu0 0.0
    %345 = vmatpush1.msra.mxu0 0.0
    %346 = vmatprep.subr.mxu0 0.0
    %347 = vmatpush1.msra.mxu0 0.0
    %348 = vmatprep.mubr.f32.mxu0 0.0
    %349 = vmatmul.mubr.f32.gmra.mrb[0].mxu0 %v282
    %v350 = vpop.f32.mrb[0].mxu0
    %v351 = vadd.f32 0.0, %v350
    %v352 = vpop.f32.mrb[0].mxu0
    %353 = vdwg.mxu0
    %v354 = vadd.f32 %v275, %v351
    %v355 = vld [vmem:[%s6] sm:$0x1]
    %v357 = vlaneseq
    %v358 = vshrl.u32 %v357, 7
    %v359 = vsub.s32 0, %v358
    %v360 = vrot.slane %v355, %v359
    %v362 = vadd.f32 %v354, %v360
    %v363 = vmax.f32 %v362, 0.0
    %v364 = vld [vmem:[#allocation8] sm:$0xff]
    %v365 = vld [vmem:[#allocation8 + $0x8] sm:$0xff]
    %v366 = vld [vmem:[#allocation8 + $0x10] sm:$0xff]
    %v367 = vld [vmem:[#allocation8 + $0x18] sm:$0xff]
    %v368 = vld [vmem:[#allocation8 + $0x20] sm:$0xff]
    %v369 = vld [vmem:[#allocation8 + $0x28] sm:$0xff]
    %v370 = vld [vmem:[#allocation8 + $0x30] sm:$0xff]
    %v371 = vld [vmem:[#allocation8 + $0x38] sm:$0xff]
    %v372 = vld [vmem:[#allocation8 + $0x40] sm:$0xff]
    %v373 = vld [vmem:[#allocation8 + $0x48] sm:$0xff]
    %v374 = vld [vmem:[#allocation8 + $0x50] sm:$0xff]
    %v375 = vld [vmem:[#allocation8 + $0x58] sm:$0xff]
    %v376 = vld [vmem:[#allocation8 + $0x60] sm:$0xff]
    %v377 = vld [vmem:[#allocation8 + $0x68] sm:$0xff]
    %v378 = vld [vmem:[#allocation8 + $0x70] sm:$0xff]
    %v379 = vld [vmem:[#allocation8 + $0x78] sm:$0xff]
    %v380 = vld [vmem:[%s8] sm:$0x1]
    %v382 = vlaneseq
    %v383 = vshrl.u32 %v382, 7
    %v384 = vsub.s32 0, %v383
    %v385 = vrot.slane %v380, %v384
    %387 = vmatprep.subr.mxu0 0.0
    %388 = vmatpush1.msra.mxu0 %v364
    %389 = vmatprep.subr.mxu0 0.0
    %390 = vmatpush1.msra.mxu0 %v365
    %391 = vmatprep.subr.mxu0 0.0
    %392 = vmatpush1.msra.mxu0 %v366
    %393 = vmatprep.subr.mxu0 0.0
    %394 = vmatpush1.msra.mxu0 %v367
    %395 = vmatprep.subr.mxu0 0.0
    %396 = vmatpush1.msra.mxu0 %v368
    %397 = vmatprep.subr.mxu0 0.0
    %398 = vmatpush1.msra.mxu0 %v369
    %399 = vmatprep.subr.mxu0 0.0
    %400 = vmatpush1.msra.mxu0 %v370
    %401 = vmatprep.subr.mxu0 0.0
    %402 = vmatpush1.msra.mxu0 %v371
    %403 = vmatprep.subr.mxu0 0.0
    %404 = vmatpush1.msra.mxu0 %v372
    %405 = vmatprep.subr.mxu0 0.0
    %406 = vmatpush1.msra.mxu0 %v373
    %407 = vmatprep.subr.mxu0 0.0
    %408 = vmatpush1.msra.mxu0 %v374
    %409 = vmatprep.subr.mxu0 0.0
    %410 = vmatpush1.msra.mxu0 %v375
    %411 = vmatprep.subr.mxu0 0.0
    %412 = vmatpush1.msra.mxu0 %v376
    %413 = vmatprep.subr.mxu0 0.0
    %414 = vmatpush1.msra.mxu0 %v377
    %415 = vmatprep.subr.mxu0 0.0
    %416 = vmatpush1.msra.mxu0 %v378
    %417 = vmatprep.subr.mxu0 0.0
    %418 = vmatpush1.msra.mxu0 %v379
    %419 = vmatprep.subr.mxu0 0.0
    %420 = vmatpush1.msra.mxu0 0.0
    %421 = vmatprep.subr.mxu0 0.0
    %422 = vmatpush1.msra.mxu0 0.0
    %423 = vmatprep.subr.mxu0 0.0
    %424 = vmatpush1.msra.mxu0 0.0
    %425 = vmatprep.subr.mxu0 0.0
    %426 = vmatpush1.msra.mxu0 0.0
    %427 = vmatprep.subr.mxu0 0.0
    %428 = vmatpush1.msra.mxu0 0.0
    %429 = vmatprep.subr.mxu0 0.0
    %430 = vmatpush1.msra.mxu0 0.0
    %431 = vmatprep.subr.mxu0 0.0
    %432 = vmatpush1.msra.mxu0 0.0
    %433 = vmatprep.subr.mxu0 0.0
    %434 = vmatpush1.msra.mxu0 0.0
    %435 = vmatprep.subr.mxu0 0.0
    %436 = vmatpush1.msra.mxu0 0.0
    %437 = vmatprep.subr.mxu0 0.0
    %438 = vmatpush1.msra.mxu0 0.0
    %439 = vmatprep.subr.mxu0 0.0
    %440 = vmatpush1.msra.mxu0 0.0
    %441 = vmatprep.subr.mxu0 0.0
    %442 = vmatpush1.msra.mxu0 0.0
    %443 = vmatprep.subr.mxu0 0.0
    %444 = vmatpush1.msra.mxu0 0.0
    %445 = vmatprep.subr.mxu0 0.0
    %446 = vmatpush1.msra.mxu0 0.0
    %447 = vmatprep.subr.mxu0 0.0
    %448 = vmatpush1.msra.mxu0 0.0
    %449 = vmatprep.subr.mxu0 0.0
    %450 = vmatpush1.msra.mxu0 0.0
    %451 = vmatprep.mubr.f32.mxu0 0.0
    %452 = vmatmul.mubr.f32.gmra.mrb[0].mxu0 %v363
    %v453 = vpop.f32.mrb[0].mxu0
    %v454 = vadd.f32 %v385, %v453
    %v455 = vpop.f32.mrb[0].mxu0
    %456 = vdwg.mxu0
    %v457 = vmax.f32 %v454, 0.0
    %v458 = vld [vmem:[#allocation10] sm:$0xff]
    %v459 = vld [vmem:[#allocation10 + $0x8] sm:$0xff]
    %v460 = vld [vmem:[#allocation10 + $0x10] sm:$0xff]
    %v461 = vld [vmem:[#allocation10 + $0x18] sm:$0xff]
    %v462 = vld [vmem:[#allocation10 + $0x20] sm:$0xff]
    %v463 = vld [vmem:[#allocation10 + $0x28] sm:$0xff]
    %v464 = vld [vmem:[#allocation10 + $0x30] sm:$0xff]
    %v465 = vld [vmem:[#allocation10 + $0x38] sm:$0xff]
    %v466 = vld [vmem:[#allocation10 + $0x40] sm:$0xff]
    %v467 = vld [vmem:[#allocation10 + $0x48] sm:$0xff]
    %v468 = vld [vmem:[#allocation10 + $0x50] sm:$0xff]
    %v469 = vld [vmem:[#allocation10 + $0x58] sm:$0xff]
    %v470 = vld [vmem:[#allocation10 + $0x60] sm:$0xff]
    %v471 = vld [vmem:[#allocation10 + $0x68] sm:$0xff]
    %v472 = vld [vmem:[#allocation10 + $0x70] sm:$0xff]
    %v473 = vld [vmem:[#allocation10 + $0x78] sm:$0xff]
    %v474 = vld [vmem:[%s10] sm:$0x1]
    %v476 = vlaneseq
    %v477 = vshrl.u32 %v476, 7
    %v478 = vsub.s32 0, %v477
    %v479 = vrot.slane %v474, %v478
    %481 = vmatprep.subr.mxu0 0.0
    %482 = vmatpush1.msra.mxu0 %v458
    %483 = vmatprep.subr.mxu0 0.0
    %484 = vmatpush1.msra.mxu0 %v459
    %485 = vmatprep.subr.mxu0 0.0
    %486 = vmatpush1.msra.mxu0 %v460
    %487 = vmatprep.subr.mxu0 0.0
    %488 = vmatpush1.msra.mxu0 %v461
    %489 = vmatprep.subr.mxu0 0.0
    %490 = vmatpush1.msra.mxu0 %v462
    %491 = vmatprep.subr.mxu0 0.0
    %492 = vmatpush1.msra.mxu0 %v463
    %493 = vmatprep.subr.mxu0 0.0
    %494 = vmatpush1.msra.mxu0 %v464
    %495 = vmatprep.subr.mxu0 0.0
    %496 = vmatpush1.msra.mxu0 %v465
    %497 = vmatprep.subr.mxu0 0.0
    %498 = vmatpush1.msra.mxu0 %v466
    %499 = vmatprep.subr.mxu0 0.0
    %500 = vmatpush1.msra.mxu0 %v467
    %501 = vmatprep.subr.mxu0 0.0
    %502 = vmatpush1.msra.mxu0 %v468
    %503 = vmatprep.subr.mxu0 0.0
    %504 = vmatpush1.msra.mxu0 %v469
    %505 = vmatprep.subr.mxu0 0.0
    %506 = vmatpush1.msra.mxu0 %v470
    %507 = vmatprep.subr.mxu0 0.0
    %508 = vmatpush1.msra.mxu0 %v471
    %509 = vmatprep.subr.mxu0 0.0
    %510 = vmatpush1.msra.mxu0 %v472
    %511 = vmatprep.subr.mxu0 0.0
    %512 = vmatpush1.msra.mxu0 %v473
    %513 = vmatprep.subr.mxu0 0.0
    %514 = vmatpush1.msra.mxu0 0.0
    %515 = vmatprep.subr.mxu0 0.0
    %516 = vmatpush1.msra.mxu0 0.0
    %517 = vmatprep.subr.mxu0 0.0
    %518 = vmatpush1.msra.mxu0 0.0
    %519 = vmatprep.subr.mxu0 0.0
    %520 = vmatpush1.msra.mxu0 0.0
    %521 = vmatprep.subr.mxu0 0.0
    %522 = vmatpush1.msra.mxu0 0.0
    %523 = vmatprep.subr.mxu0 0.0
    %524 = vmatpush1.msra.mxu0 0.0
    %525 = vmatprep.subr.mxu0 0.0
    %526 = vmatpush1.msra.mxu0 0.0
    %527 = vmatprep.subr.mxu0 0.0
    %528 = vmatpush1.msra.mxu0 0.0
    %529 = vmatprep.subr.mxu0 0.0
    %530 = vmatpush1.msra.mxu0 0.0
    %531 = vmatprep.subr.mxu0 0.0
    %532 = vmatpush1.msra.mxu0 0.0
    %533 = vmatprep.subr.mxu0 0.0
    %534 = vmatpush1.msra.mxu0 0.0
    %535 = vmatprep.subr.mxu0 0.0
    %536 = vmatpush1.msra.mxu0 0.0
    %537 = vmatprep.subr.mxu0 0.0
    %538 = vmatpush1.msra.mxu0 0.0
    %539 = vmatprep.subr.mxu0 0.0
    %540 = vmatpush1.msra.mxu0 0.0
    %541 = vmatprep.subr.mxu0 0.0
    %542 = vmatpush1.msra.mxu0 0.0
    %543 = vmatprep.subr.mxu0 0.0
    %544 = vmatpush1.msra.mxu0 0.0
    %545 = vmatprep.mubr.f32.mxu0 0.0
    %546 = vmatmul.mubr.f32.gmra.mrb[0].mxu0 %v457
    %v547 = vpop.f32.mrb[0].mxu0
    %v548 = vadd.f32 %v479, %v547
    %v549 = vpop.f32.mrb[0].mxu0
    %550 = vdwg.mxu0
    %551 = vmax.xlane.f32.xlu0 %v548
    %v552 = vpop.xlane.xlu0 %551
    %v553 = vsub.f32 %v548, %v552
    %v554 = vmul.f32 %v553, 1.442695
    %v555 = vpow.pop %v554
    %556 = vadd.xlane.f32.xlu0 %v555
    %v557 = vpop.xlane.xlu0 %556
    %v558 = vlog2.pop %v557
    %v559 = vmul.f32 %v558, 0.6931472
    %v560 = vsub.f32 %v553, %v559
    %561 = vst [vmem:[#allocation11] sm:$0xff] %v560
    // Predicated region
    $region66: #{_forward_impl.1} parent=1 // pred_check
      _
    $region67: #{_forward_impl.1} parent=1 // pred_check_branch
      %563 = sbr.rel (0) target = $region69
    $region68: #{_forward_impl.1} parent=1 // pred_region
      %s565 = ssub.s32 128, 128
      %566 = vsyncadd [#allocation4], %s565
      %s568 = sshll.u32 [#allocation11], 4
      %s569 = int_to_ptr.vmem [resolvable:$true] %s568
      %571 = dma.vmem_to_hbm [thread:$0]  %s569, 128, %s11, [#allocation4]
    $region69: #{_forward_impl.1} parent=1 // pred_fallthru
      _
    // Predicated region
    $region70: #{_forward_impl.1} parent=1 // pred_check
      _
    $region71: #{_forward_impl.1} parent=1 // pred_check_branch
      %573 = sbr.rel (0) target = $region73
    $region72: #{_forward_impl.1} parent=1 // pred_region
      %574 = dma.done [#allocation4], 128
    $region73: #{_forward_impl.1} parent=1 // pred_fallthru
      _
    %575 = vsyncpa [#allocation3], 1
    %576 = vsyncpa [#allocation6], 1
    %577 = vsyncpa [#allocation9], 1
    %578 = vsyncpa [#allocation4], 1

</llo_original>
